<compile_context>
chip_gen: v5e
topology: v5e:2x2
jax: 0.10.0
libtpu: 0.0.40
codegen_flags: <defaults>
</compile_context>

<pallas_src>
import jax
import jax.numpy as jnp
from jax import lax
from jax.experimental import pallas as pl
from jax.experimental.pallas import tpu as pltpu


def _round_up(x, m):
    return ((x + m - 1) // m) * m


def mlp_kernel(x_ref, w1_ref, w2_ref, w34_ref, b_ref, o_ref):
    """One batch tile, fully in VMEM.
       x:   (bt, in_dim) f32   (natural layout, batch on sublanes)
       w1:  (64, in_dim) bf16; w2: (32, 64) bf16; w34: (out, 32) bf16
       b:   (96 + out, 1) f32  packed [b1; b2; b34]
       o:   (out, bt) f32      (batch lane-dense)
    """
    x = x_ref[...].astype(jnp.bfloat16)          # (bt, in_dim)

    # Packed biases (static, sublane-aligned f32 slices).
    b1 = b_ref[0:64, :]                          # (64, 1)
    b2 = b_ref[64:96, :]                         # (32, 1)
    b34 = b_ref[96:, :]                          # (out, 1)

    # Linear1 + ReLU: contract in_dim (trans-b form) so the result is (64, bt).
    h = lax.dot_general(w1_ref[...], x,
                        dimension_numbers=(((1,), (1,)), ((), ())),
                        preferred_element_type=jnp.float32) + b1
    h = jnp.maximum(h.astype(jnp.bfloat16), 0)   # ReLU in bf16

    # Linear2 + Sigmoid (ReLU after sigmoid elided: sigmoid output is > 0).
    h = jnp.dot(w2_ref[...], h, preferred_element_type=jnp.float32) + b2
    h = jax.nn.sigmoid(h.astype(jnp.bfloat16))   # (32, bt) bf16

    # Fused Linear3 @ Linear4.
    h = jnp.dot(w34_ref[...], h, preferred_element_type=jnp.float32) + b34
    o_ref[...] = h.astype(o_ref.dtype)


def mymodel_forward(x, params, *, batch_tile=8192):
    """x: (B, input_dim) float32 (PyTorch convention).
       params: PyTorch-native layout, w_i: (out, in) f32, b_i: (out, 1) f32.
       Returns (B, output_dim) float32."""
    B, in_dim = x.shape
    out_dim = params["w4"].shape[0]

    # Lane-dense batch tile: multiple of 128, large enough to amortize per-step
    # overhead, capped so there are >= 2 grid steps when the batch allows (v7x
    # dual-TensorCore megacore split of the "parallel" axis).
    b128 = _round_up(max(B, 1), 128)
    bt = _round_up(min(batch_tile, b128), 128)
    if b128 > 128:
        bt = min(bt, _round_up((b128 + 1) // 2, 128))
    b_pad = _round_up(B, bt)
    grid = (b_pad // bt,)

    # Cheap contiguous zero-pad of the batch axis only when needed (no transpose,
    # no dtype-conversion pass over x in the wrapper).
    if b_pad != B:
        x = jnp.pad(x, ((0, b_pad - B), (0, 0)))

    w1 = params["w1"].astype(jnp.bfloat16)                    # (64, in_dim)
    w2 = params["w2"].astype(jnp.bfloat16)                    # (32, 64)
    # Fuse linear3 + linera4 (no nonlinearity in between); fold done in f32.
    w34 = (params["w4"] @ params["w3"]).astype(jnp.bfloat16)  # (out_dim, 32)
    b34 = params["w4"] @ params["b3"] + params["b4"]          # (out_dim, 1)
    b_all = jnp.concatenate([params["b1"], params["b2"], b34],
                            axis=0).astype(jnp.float32)       # (96 + out_dim, 1)

    rep = lambda i: (0, 0)                                     # resident params

    flops = 2 * b_pad * (in_dim * 64 + 64 * 32 + 32 * out_dim)
    transcendentals = b_pad * 32
    bytes_accessed = (
        in_dim * b_pad * 4 + out_dim * b_pad * 4 +
        2 * (64 * in_dim + 32 * 64 + out_dim * 32) + 4 * (96 + out_dim))

    out_t = pl.pallas_call(
        mlp_kernel,
        out_shape=jax.ShapeDtypeStruct((out_dim, b_pad), jnp.float32),
        grid=grid,
        in_specs=[
            pl.BlockSpec((bt, in_dim), lambda i: (i, 0)),
            pl.BlockSpec(w1.shape, rep),
            pl.BlockSpec(w2.shape, rep),
            pl.BlockSpec(w34.shape, rep),
            pl.BlockSpec(b_all.shape, rep),
        ],
        out_specs=pl.BlockSpec((out_dim, bt), lambda i: (0, i)),
        compiler_params=pltpu.CompilerParams(
            dimension_semantics=("parallel",),
            vmem_limit_bytes=32 * 1024 * 1024),
        cost_estimate=pl.CostEstimate(
            flops=flops,
            transcendentals=transcendentals,
            bytes_accessed=bytes_accessed),
    )(x, w1, w2, w34, b_all)

    # Back to PyTorch (B, out_dim) convention; padded columns discarded.
    # (out_dim is tiny, so this transpose is negligible.)
    return out_t[:, :B].T


def init_params(key, input_dim, output_dim):
    """PyTorch-default-style init (uniform +-1/sqrt(fan_in)), PyTorch-native
    (out, in) weight layout and (out, 1) biases."""
    dims = [(input_dim, 64), (64, 32), (32, 16), (16, output_dim)]
    params = {}
    for idx, (fin, fout) in enumerate(dims, start=1):
        key, kw, kb = jax.random.split(key, 3)
        bound = 1.0 / jnp.sqrt(jnp.float32(fin))
        params[f"w{idx}"] = jax.random.uniform(
            kw, (fout, fin), jnp.float32, minval=-bound, maxval=bound)
        params[f"b{idx}"] = jax.random.uniform(
            kb, (fout, 1), jnp.float32, minval=-bound, maxval=bound)
    return params


def reference_forward(x, params):
    """Pure-JAX f32 reference of the PyTorch forward (incl. the no-op ReLU after
    sigmoid), using the same bf16-rounded weights as the kernel."""
    def w(name):
        return params[name].astype(jnp.bfloat16).astype(jnp.float32)
    h = jnp.maximum(x @ w("w1").T + params["b1"].T, 0.0)
    h = jax.nn.sigmoid(h @ w("w2").T + params["b2"].T)
    h = jnp.maximum(h, 0.0)          # no-op, kept for fidelity to the PyTorch code
    h = h @ w("w3").T + params["b3"].T
    return h @ w("w4").T + params["b4"].T


if __name__ == "__main__":
    # ddarung: 9 input features, 1 regression target; small batch of 8.
    B, INPUT_DIM, OUTPUT_DIM = 8, 9, 1

    key = jax.random.PRNGKey(0)
    key, kx = jax.random.split(key)
    x = jax.random.normal(kx, (B, INPUT_DIM), jnp.float32)
    params = init_params(key, INPUT_DIM, OUTPUT_DIM)

    out = mymodel_forward(x, params)
    out = jax.block_until_ready(out)

    ref = reference_forward(x, params)
    assert out.shape == (B, OUTPUT_DIM)
    # bf16 weights/activations with f32 MXU accumulation (+ one extra bf16 rounding
    # from the host-side W4@W3 fold) vs an f32-activation reference.
    assert jnp.allclose(out, ref, atol=4e-2, rtol=4e-2), "mismatch vs pure-JAX reference"

    print("KERNEL_OK")
</pallas_src>

<mosaic_0001>
module attributes {stable_mosaic.version = 11 : i64} {
  func.func @mlp_kernel(%arg0: i32, %arg1: memref<128x9xf32, #tpu.memory_space<vmem>>, %arg2: memref<64x9xbf16, #tpu.memory_space<vmem>>, %arg3: memref<32x64xbf16, #tpu.memory_space<vmem>>, %arg4: memref<1x32xbf16, #tpu.memory_space<vmem>>, %arg5: memref<97x1xf32, #tpu.memory_space<vmem>>, %arg6: memref<1x128xf32, #tpu.memory_space<vmem>>) attributes {dimension_semantics = [#tpu.dimension_semantics<parallel>], iteration_bounds = array<i64: 1>, scalar_prefetch = 0 : i64, scratch_operands = 0 : i64, tpu.core_type = #tpu.core_type<tc>, window_params = [{transform_indices = @transform_0, window_bounds = array<i64: 128, 9>}, {pipeline_mode = #tpu.pipeline_mode<synchronous>, transform_indices = @transform_1, window_bounds = array<i64: 64, 9>}, {pipeline_mode = #tpu.pipeline_mode<synchronous>, transform_indices = @transform_2, window_bounds = array<i64: 32, 64>}, {pipeline_mode = #tpu.pipeline_mode<synchronous>, transform_indices = @transform_3, window_bounds = array<i64: 1, 32>}, {pipeline_mode = #tpu.pipeline_mode<synchronous>, transform_indices = @transform_4, window_bounds = array<i64: 97, 1>}, {transform_indices = @transform_5, window_bounds = array<i64: 1, 128>}]} {
    %c0 = arith.constant 0 : index
    %c0_0 = arith.constant 0 : index
    %0 = vector.load %arg1[%c0, %c0_0] : memref<128x9xf32, #tpu.memory_space<vmem>>, vector<128x9xf32>
    %1 = arith.truncf %0 : vector<128x9xf32> to vector<128x9xbf16>
    %c0_1 = arith.constant 0 : index
    %c0_2 = arith.constant 0 : index
    %2 = vector.load %arg5[%c0_1, %c0_2] : memref<97x1xf32, #tpu.memory_space<vmem>>, vector<64x1xf32>
    %c64 = arith.constant 64 : index
    %c0_3 = arith.constant 0 : index
    %3 = vector.load %arg5[%c64, %c0_3] : memref<97x1xf32, #tpu.memory_space<vmem>>, vector<32x1xf32>
    %c96 = arith.constant 96 : index
    %c0_4 = arith.constant 0 : index
    %4 = vector.load %arg5[%c96, %c0_4] : memref<97x1xf32, #tpu.memory_space<vmem>>, vector<1x1xf32>
    %c0_5 = arith.constant 0 : index
    %c0_6 = arith.constant 0 : index
    %5 = vector.load %arg2[%c0_5, %c0_6] : memref<64x9xbf16, #tpu.memory_space<vmem>>, vector<64x9xbf16>
    %cst = arith.constant dense<0.000000e+00> : vector<64x128xf32>
    %6 = tpu.matmul %5, %1, %cst {dimension_numbers = #tpu.dot_dimension_numbers<[1], [1], [0], [0], [0, 0, 1, 0], [], []>} : vector<64x9xbf16>, vector<128x9xbf16>, vector<64x128xf32> -> vector<64x128xf32>
    %7 = vector.broadcast %2 : vector<64x1xf32> to vector<64x128xf32>
    %8 = arith.addf %6, %7 : vector<64x128xf32>
    %9 = arith.truncf %8 : vector<64x128xf32> to vector<64x128xbf16>
    %cst_7 = arith.constant 0.000000e+00 : bf16
    %10 = vector.broadcast %cst_7 : bf16 to vector<64x128xbf16>
    %11 = arith.maximumf %9, %10 : vector<64x128xbf16>
    %c0_8 = arith.constant 0 : index
    %c0_9 = arith.constant 0 : index
    %12 = vector.load %arg3[%c0_8, %c0_9] : memref<32x64xbf16, #tpu.memory_space<vmem>>, vector<32x64xbf16>
    %cst_10 = arith.constant dense<0.000000e+00> : vector<32x128xf32>
    %13 = tpu.matmul %12, %11, %cst_10 {dimension_numbers = #tpu.dot_dimension_numbers<[1], [0], [0], [1], [0, 0, 1, 1], [], []>} : vector<32x64xbf16>, vector<64x128xbf16>, vector<32x128xf32> -> vector<32x128xf32>
    %14 = vector.broadcast %3 : vector<32x1xf32> to vector<32x128xf32>
    %15 = arith.addf %13, %14 : vector<32x128xf32>
    %16 = arith.truncf %15 : vector<32x128xf32> to vector<32x128xbf16>
    %17 = arith.negf %16 : vector<32x128xbf16>
    %18 = math.exp %17 : vector<32x128xbf16>
    %cst_11 = arith.constant 1.000000e+00 : bf16
    %19 = vector.broadcast %cst_11 : bf16 to vector<32x128xbf16>
    %20 = arith.addf %19, %18 : vector<32x128xbf16>
    %21 = arith.divf %19, %20 : vector<32x128xbf16>
    %c0_12 = arith.constant 0 : index
    %c0_13 = arith.constant 0 : index
    %22 = vector.load %arg4[%c0_12, %c0_13] : memref<1x32xbf16, #tpu.memory_space<vmem>>, vector<1x32xbf16>
    %cst_14 = arith.constant dense<0.000000e+00> : vector<1x128xf32>
    %23 = tpu.matmul %22, %21, %cst_14 {dimension_numbers = #tpu.dot_dimension_numbers<[1], [0], [0], [1], [0, 0, 1, 1], [], []>} : vector<1x32xbf16>, vector<32x128xbf16>, vector<1x128xf32> -> vector<1x128xf32>
    %24 = vector.broadcast %4 : vector<1x1xf32> to vector<1x128xf32>
    %25 = arith.addf %23, %24 : vector<1x128xf32>
    %c0_15 = arith.constant 0 : index
    %c0_16 = arith.constant 0 : index
    %26 = vector.load %arg6[%c0_15, %c0_16] : memref<1x128xf32, #tpu.memory_space<vmem>>, vector<1x128xf32>
    tpu.vector_store %arg6[%c0_15, %c0_16], %25 {strides = array<i32>} : memref<1x128xf32, #tpu.memory_space<vmem>>, vector<1x128xf32>,
    return
  }
  func.func @transform_0(%arg0: i32) -> (i32, i32) {
    %c0_i32 = arith.constant 0 : i32
    %c0_i32_0 = arith.constant 0 : i32
    return %arg0, %c0_i32 : i32, i32
  }
  func.func @transform_1(%arg0: i32) -> (i32, i32) {
    %c0_i32 = arith.constant 0 : i32
    %c0_i32_0 = arith.constant 0 : i32
    %c0_i32_1 = arith.constant 0 : i32
    return %c0_i32, %c0_i32_0 : i32, i32
  }
  func.func @transform_2(%arg0: i32) -> (i32, i32) {
    %c0_i32 = arith.constant 0 : i32
    %c0_i32_0 = arith.constant 0 : i32
    %c0_i32_1 = arith.constant 0 : i32
    return %c0_i32, %c0_i32_0 : i32, i32
  }
  func.func @transform_3(%arg0: i32) -> (i32, i32) {
    %c0_i32 = arith.constant 0 : i32
    %c0_i32_0 = arith.constant 0 : i32
    %c0_i32_1 = arith.constant 0 : i32
    return %c0_i32, %c0_i32_0 : i32, i32
  }
  func.func @transform_4(%arg0: i32) -> (i32, i32) {
    %c0_i32 = arith.constant 0 : i32
    %c0_i32_0 = arith.constant 0 : i32
    %c0_i32_1 = arith.constant 0 : i32
    return %c0_i32, %c0_i32_0 : i32, i32
  }
  func.func @transform_5(%arg0: i32) -> (i32, i32) {
    %c0_i32 = arith.constant 0 : i32
    %c0_i32_0 = arith.constant 0 : i32
    return %c0_i32, %arg0 : i32, i32
  }
}

</mosaic_0001>

<llo_original>
// kernel: tpu_custom_call.1
$region0: #{tpu_custom_call.1}
  #allocation0 [shape = 'u32[]', space=smem, size = 0x4, offset = 0x4, fixed_abs, tag = 'smem constant byte address 0x4 - core index']
  #allocation1 [shape = 'u32[72,128]{1,0:T(1,128)}', space=vmem, size = 0x9000, scoped, tag = 'internal scratch']
  %s0 = inlined_call_operand.vmem [shape: f32[128,9], index: 0, kind: input, shape index: {}]
  %s1 = inlined_call_operand.vmem [shape: bf16[64,9], index: 1, kind: input, shape index: {}]
  %s2 = inlined_call_operand.vmem [shape: bf16[32,64], index: 2, kind: input, shape index: {}]
  %s3 = inlined_call_operand.vmem [shape: bf16[1,32], index: 3, kind: input, shape index: {}]
  %s4 = inlined_call_operand.vmem [shape: f32[97,1], index: 4, kind: input, shape index: {}]
  %s5 = inlined_call_operand.hbm [shape: f32[1,128], index: 5, kind: output, shape index: {}]
  %s6 = sld [smem:[#allocation0]]
  $region30: #{tpu_custom_call.1} parent=0
    _
  %s8 = ssub.s32 1, %s6
  %s9 = scalar_select 0, %s8, %s6
  $region1: #{tpu_custom_call.1} parent=0
    #allocation2 [shape = 'u8[512]{0}', space=vmem, size = 0x400, scoped, tag = 'output window, operand 0, single buffered']
    #allocation3 [shape = 's32[1]{0}', space=sflag, size = 0x4, scoped, tag = 'scoped memory for tpu_custom_call.1']
    %10 = vsyncpa [#allocation3], 0
    // Predicated region
    $region2: #{tpu_custom_call.1} parent=1 // pred_check
      _
    $region3: #{tpu_custom_call.1} parent=1 // pred_check_branch
      %12 = sbr.rel (0) target = $region5
    $region4: #{tpu_custom_call.1} parent=1 // pred_region
      _
    $region5: #{tpu_custom_call.1} parent=1 // pred_fallthru
      _
    // Predicated region
    $region6: #{tpu_custom_call.1} parent=1 // pred_check
      _
    $region7: #{tpu_custom_call.1} parent=1 // pred_check_branch
      %14 = sbr.rel (0) target = $region9
    $region8: #{tpu_custom_call.1} parent=1 // pred_region
      _
    $region9: #{tpu_custom_call.1} parent=1 // pred_fallthru
      _
    // Predicated region
    $region10: #{tpu_custom_call.1} parent=1 // pred_check
      _
    $region11: #{tpu_custom_call.1} parent=1 // pred_check_branch
      %16 = sbr.rel (0) target = $region13
    $region12: #{tpu_custom_call.1} parent=1 // pred_region
      _
    $region13: #{tpu_custom_call.1} parent=1 // pred_fallthru
      _
    // Predicated region
    $region14: #{tpu_custom_call.1} parent=1 // pred_check
      _
    $region15: #{tpu_custom_call.1} parent=1 // pred_check_branch
      %18 = sbr.rel (0) target = $region17
    $region16: #{tpu_custom_call.1} parent=1 // pred_region
      _
    $region17: #{tpu_custom_call.1} parent=1 // pred_fallthru
      _
    // Predicated region
    $region18: #{tpu_custom_call.1} parent=1 // pred_check
      _
    $region19: #{tpu_custom_call.1} parent=1 // pred_check_branch
      %20 = sbr.rel (0) target = $region21
    $region20: #{tpu_custom_call.1} parent=1 // pred_region
      _
    $region21: #{tpu_custom_call.1} parent=1 // pred_fallthru
      _
    %v23 = vld [vmem:[%s0] sm:$0xff]
    %v24 = vld [vmem:[%s0 + $0x8] sm:$0xff]
    %v25 = vld [vmem:[%s0 + $0x10] sm:$0xff]
    %v26 = vld [vmem:[%s0 + $0x18] sm:$0xff]
    %v27 = vld [vmem:[%s0 + $0x20] sm:$0xff]
    %v28 = vld [vmem:[%s0 + $0x28] sm:$0xff]
    %v29 = vld [vmem:[%s0 + $0x30] sm:$0xff]
    %v30 = vld [vmem:[%s0 + $0x38] sm:$0xff]
    %v31 = vld [vmem:[%s0 + $0x40] sm:$0xff]
    %v32 = vld [vmem:[%s0 + $0x48] sm:$0xff]
    %v33 = vld [vmem:[%s0 + $0x50] sm:$0xff]
    %v34 = vld [vmem:[%s0 + $0x58] sm:$0xff]
    %v35 = vld [vmem:[%s0 + $0x60] sm:$0xff]
    %v36 = vld [vmem:[%s0 + $0x68] sm:$0xff]
    %v37 = vld [vmem:[%s0 + $0x70] sm:$0xff]
    %v38 = vld [vmem:[%s0 + $0x78] sm:$0xff]
    %v39 = vpack.c.bf16 %v24, %v23
    %v40 = vpack.c.bf16 %v26, %v25
    %v41 = vpack.c.bf16 %v28, %v27
    %v42 = vpack.c.bf16 %v30, %v29
    %v43 = vpack.c.bf16 %v32, %v31
    %v44 = vpack.c.bf16 %v34, %v33
    %v45 = vpack.c.bf16 %v36, %v35
    %v46 = vpack.c.bf16 %v38, %v37
    %v47 = vld [vmem:[%s4] sm:$0xff]
    %v48 = vld [vmem:[%s4 + $0x8] sm:$0xff]
    %v49 = vld [vmem:[%s4 + $0x10] sm:$0xff]
    %v50 = vld [vmem:[%s4 + $0x18] sm:$0xff]
    %v51 = vld [vmem:[%s4 + $0x20] sm:$0xff]
    %v52 = vld [vmem:[%s4 + $0x28] sm:$0xff]
    %v53 = vld [vmem:[%s4 + $0x30] sm:$0xff]
    %v54 = vld [vmem:[%s4 + $0x38] sm:$0xff]
    %v55 = vld [vmem:[%s4 + $0x40] sm:$0xff]
    %v56 = vld [vmem:[%s4 + $0x48] sm:$0xff]
    %v57 = vld [vmem:[%s4 + $0x50] sm:$0xff]
    %v58 = vld [vmem:[%s4 + $0x58] sm:$0xff]
    %v59 = vld [vmem:[%s4 + $0x60] sm:$0x1]
    %v60 = vld [vmem:[%s1] sm:$0xf]
    %v61 = vld [vmem:[%s1 + $0x4] sm:$0xf]
    %v62 = vld [vmem:[%s1 + $0x8] sm:$0xf]
    %v63 = vld [vmem:[%s1 + $0xc] sm:$0xf]
    %v64 = vld [vmem:[%s1 + $0x10] sm:$0xf]
    %v65 = vld [vmem:[%s1 + $0x14] sm:$0xf]
    %v66 = vld [vmem:[%s1 + $0x18] sm:$0xf]
    %v67 = vld [vmem:[%s1 + $0x1c] sm:$0xf]
    %69 = vset.pattern.permute.xlu0 0
    %70 = vperm.xlu0 %69, %v47
    %v71 = vpop.permute.xlu0 %70
    %74 = vset.pattern.permute.xlu0 0
    %75 = vperm.xlu0 %74, %v48
    %v76 = vpop.permute.xlu0 %75
    %79 = vset.pattern.permute.xlu0 0
    %80 = vperm.xlu0 %79, %v49
    %v81 = vpop.permute.xlu0 %80
    %84 = vset.pattern.permute.xlu0 0
    %85 = vperm.xlu0 %84, %v50
    %v86 = vpop.permute.xlu0 %85
    %89 = vset.pattern.permute.xlu0 0
    %90 = vperm.xlu0 %89, %v51
    %v91 = vpop.permute.xlu0 %90
    %94 = vset.pattern.permute.xlu0 0
    %95 = vperm.xlu0 %94, %v52
    %v96 = vpop.permute.xlu0 %95
    %99 = vset.pattern.permute.xlu0 0
    %100 = vperm.xlu0 %99, %v53
    %v101 = vpop.permute.xlu0 %100
    %104 = vset.pattern.permute.xlu0 0
    %105 = vperm.xlu0 %104, %v54
    %v106 = vpop.permute.xlu0 %105
    %v116 = vunpack.c.l.b16 %v60
    %v117 = vunpack.c.l.b16 %v61
    %v118 = vunpack.c.l.b16 %v62
    %v119 = vunpack.c.l.b16 %v63
    %v120 = vunpack.c.l.b16 %v64
    %v121 = vunpack.c.l.b16 %v65
    %v122 = vunpack.c.l.b16 %v66
    %v123 = vunpack.c.l.b16 %v67
    %v124 = vpack.c.b16 %v117, %v116
    %v125 = vpack.c.b16 %v119, %v118
    %v126 = vpack.c.b16 %v121, %v120
    %v127 = vpack.c.b16 %v123, %v122
    %vm128 = vcmask 72704
    %v130 = vsel %vm128, %v124, 0
    %v133 = vsel %vm128, %v125, 0
    %v136 = vsel %vm128, %v126, 0
    %v139 = vsel %vm128, %v127, 0
    %v142 = vsel %vm128, %v39, 0
    %v145 = vsel %vm128, %v40, 0
    %v148 = vsel %vm128, %v41, 0
    %v151 = vsel %vm128, %v42, 0
    %v154 = vsel %vm128, %v43, 0
    %v157 = vsel %vm128, %v44, 0
    %v160 = vsel %vm128, %v45, 0
    %v163 = vsel %vm128, %v46, 0
    %165 = vmatpush.bf16.xpose.msra.mxu0 %v163
    %166 = vmatpush.bf16.xpose.msra.mxu0 %v160
    %167 = vmatpush.bf16.xpose.msra.mxu0 %v157
    %168 = vmatpush.bf16.xpose.msra.mxu0 %v154
    %169 = vmatpush.bf16.xpose.msra.mxu0 %v151
    %170 = vmatpush.bf16.xpose.msra.mxu0 %v148
    %171 = vmatpush.bf16.xpose.msra.mxu0 %v145
    %172 = vmatpush.bf16.xpose.msra.mxu0 %v142
    %173 = vmatmul.bf16.gmra.mxu0 %v130
    %v174 = vpop.f32.mrf.mxu0
    %v175 = vadd.f32 %v71, %v174
    %v176 = vpop.f32.mrf.mxu0
    %v177 = vadd.f32 %v76, %v176
    %178 = vmatmul.bf16.gmra.mxu0 %v133
    %v179 = vpop.f32.mrf.mxu0
    %v180 = vadd.f32 %v81, %v179
    %v181 = vpop.f32.mrf.mxu0
    %v182 = vadd.f32 %v86, %v181
    %183 = vmatmul.bf16.gmra.mxu0 %v136
    %v184 = vpop.f32.mrf.mxu0
    %v185 = vadd.f32 %v91, %v184
    %v186 = vpop.f32.mrf.mxu0
    %v187 = vadd.f32 %v96, %v186
    %188 = vmatmul.bf16.gmra.mxu0 %v139
    %v189 = vpop.f32.mrf.mxu0
    %v190 = vadd.f32 %v101, %v189
    %v191 = vpop.f32.mrf.mxu0
    %v192 = vadd.f32 %v106, %v191
    %193 = vdwg.mxu0
    %v194 = vpack.c.bf16 %v175, %v175
    %v195 = vpack.c.bf16 %v177, %v177
    %v196 = vpack.c.bf16 %v180, %v180
    %v197 = vpack.c.bf16 %v182, %v182
    %v198 = vpack.c.bf16 %v185, %v185
    %v199 = vpack.c.bf16 %v187, %v187
    %v200 = vpack.c.bf16 %v190, %v190
    %v201 = vpack.c.bf16 %v192, %v192
    %v202 = vunpack.c.l.bf16 %v194
    %v203 = vunpack.c.l.bf16 %v195
    %v204 = vunpack.c.l.bf16 %v196
    %v205 = vunpack.c.l.bf16 %v197
    %v206 = vunpack.c.l.bf16 %v198
    %v207 = vunpack.c.l.bf16 %v199
    %v208 = vunpack.c.l.bf16 %v200
    %v209 = vunpack.c.l.bf16 %v201
    %v210 = vmax.f32 %v202, 0.0
    %v211 = vmax.f32 %v203, 0.0
    %v212 = vmax.f32 %v204, 0.0
    %v213 = vmax.f32 %v205, 0.0
    %v214 = vmax.f32 %v206, 0.0
    %v215 = vmax.f32 %v207, 0.0
    %v216 = vmax.f32 %v208, 0.0
    %v217 = vmax.f32 %v209, 0.0
    %v218 = vpack.c.bf16 %v211, %v210
    %v219 = vpack.c.bf16 %v213, %v212
    %v220 = vpack.c.bf16 %v215, %v214
    %v221 = vpack.c.bf16 %v217, %v216
    %v222 = vld [vmem:[%s2] sm:$0xf]
    %v223 = vld [vmem:[%s2 + $0x4] sm:$0xf]
    %v224 = vld [vmem:[%s2 + $0x8] sm:$0xf]
    %v225 = vld [vmem:[%s2 + $0xc] sm:$0xf]
    %227 = vset.pattern.permute.xlu0 0
    %228 = vperm.xlu0 %227, %v55
    %v229 = vpop.permute.xlu0 %228
    %232 = vset.pattern.permute.xlu0 0
    %233 = vperm.xlu0 %232, %v56
    %v234 = vpop.permute.xlu0 %233
    %237 = vset.pattern.permute.xlu0 0
    %238 = vperm.xlu0 %237, %v57
    %v239 = vpop.permute.xlu0 %238
    %242 = vset.pattern.permute.xlu0 0
    %243 = vperm.xlu0 %242, %v58
    %v244 = vpop.permute.xlu0 %243
    %v250 = vunpack.c.l.b16 %v222
    %v251 = vunpack.c.l.b16 %v223
    %v252 = vunpack.c.l.b16 %v224
    %v253 = vunpack.c.l.b16 %v225
    %v254 = vpack.c.b16 %v251, %v250
    %v255 = vpack.c.b16 %v253, %v252
    %vm256 = vcmask 523264
    %v258 = vsel %vm256, %v254, 0
    %v261 = vsel %vm256, %v255, 0
    %263 = vmatpush.bf16.msra.mxu0 0
    %264 = vmatpush.bf16.msra.mxu0 0
    %265 = vmatpush.bf16.msra.mxu0 0
    %266 = vmatpush.bf16.msra.mxu0 0
    %267 = vmatpush.bf16.msra.mxu0 %v221
    %268 = vmatpush.bf16.msra.mxu0 %v220
    %269 = vmatpush.bf16.msra.mxu0 %v219
    %270 = vmatpush.bf16.msra.mxu0 %v218
    %271 = vmatmul.bf16.gmra.mxu0 %v258
    %v272 = vpop.f32.mrf.mxu0
    %v273 = vadd.f32 %v229, %v272
    %v274 = vpop.f32.mrf.mxu0
    %v275 = vadd.f32 %v234, %v274
    %276 = vmatmul.bf16.gmra.mxu0 %v261
    %v277 = vpop.f32.mrf.mxu0
    %v278 = vadd.f32 %v239, %v277
    %v279 = vpop.f32.mrf.mxu0
    %v280 = vadd.f32 %v244, %v279
    %281 = vdwg.mxu0
    %v282 = vpack.c.bf16 %v273, %v273
    %v283 = vpack.c.bf16 %v275, %v275
    %v284 = vpack.c.bf16 %v278, %v278
    %v285 = vpack.c.bf16 %v280, %v280
    %v286 = vxor.u32 %v282, 2147516416
    %v287 = vxor.u32 %v283, 2147516416
    %v288 = vxor.u32 %v284, 2147516416
    %v289 = vxor.u32 %v285, 2147516416
    %v290 = vunpack.c.l.bf16 %v286
    %v291 = vunpack.c.l.bf16 %v287
    %v292 = vunpack.c.l.bf16 %v288
    %v293 = vunpack.c.l.bf16 %v289
    %v294 = vmul.f32 %v290, 1.442695
    %v295 = vpow.pop %v294
    %v296 = vmul.f32 %v291, 1.442695
    %v297 = vpow.pop %v296
    %v298 = vmul.f32 %v292, 1.442695
    %v299 = vpow.pop %v298
    %v300 = vmul.f32 %v293, 1.442695
    %v301 = vpow.pop %v300
    %v302 = vpack.c.bf16 %v295, %v295
    %v303 = vpack.c.bf16 %v297, %v297
    %v304 = vpack.c.bf16 %v299, %v299
    %v305 = vpack.c.bf16 %v301, %v301
    %v306 = vunpack.c.l.bf16 %v302
    %v307 = vunpack.c.l.bf16 %v303
    %v308 = vunpack.c.l.bf16 %v304
    %v309 = vunpack.c.l.bf16 %v305
    %v310 = vadd.f32 %v306, 1.0
    %v311 = vadd.f32 %v307, 1.0
    %v312 = vadd.f32 %v308, 1.0
    %v313 = vadd.f32 %v309, 1.0
    %v314 = vpack.c.bf16 %v310, %v310
    %v315 = vpack.c.bf16 %v311, %v311
    %v316 = vpack.c.bf16 %v312, %v312
    %v317 = vpack.c.bf16 %v313, %v313
    %v318 = vunpack.c.h.bf16 1065369472
    %v319 = vunpack.c.l.bf16 1065369472
    %v320 = vunpack.c.h.bf16 %v314
    %v321 = vunpack.c.l.bf16 %v314
    %v322 = vrcp.pop %v320
    %v323 = vmul.f32 %v318, %v322
    %v324 = vrcp.pop %v321
    %v325 = vmul.f32 %v319, %v324
    %v326 = vpack.c.bf16 %v323, %v325
    %v327 = vunpack.c.h.bf16 %v315
    %v328 = vunpack.c.l.bf16 %v315
    %v329 = vrcp.pop %v327
    %v330 = vmul.f32 %v318, %v329
    %v331 = vrcp.pop %v328
    %v332 = vmul.f32 %v319, %v331
    %v333 = vpack.c.bf16 %v330, %v332
    %v334 = vunpack.c.h.bf16 %v316
    %v335 = vunpack.c.l.bf16 %v316
    %v336 = vrcp.pop %v334
    %v337 = vmul.f32 %v318, %v336
    %v338 = vrcp.pop %v335
    %v339 = vmul.f32 %v319, %v338
    %v340 = vpack.c.bf16 %v337, %v339
    %v341 = vunpack.c.h.bf16 %v317
    %v342 = vunpack.c.l.bf16 %v317
    %v343 = vrcp.pop %v341
    %v344 = vmul.f32 %v318, %v343
    %v345 = vrcp.pop %v342
    %v346 = vmul.f32 %v319, %v345
    %v347 = vpack.c.bf16 %v344, %v346
    %v348 = vld [vmem:[%s3] sm:$0x1]
    %350 = vset.pattern.permute.xlu0 0
    %351 = vperm.xlu0 %350, %v59
    %v352 = vpop.permute.xlu0 %351
    %v358 = vunpack.c.l.b16 %v326
    %v359 = vunpack.c.l.b16 %v333
    %v360 = vunpack.c.l.b16 %v340
    %v361 = vunpack.c.l.b16 %v347
    %v362 = vpack.c.b16 %v359, %v358
    %v363 = vpack.c.b16 %v361, %v360
    %vm366 = vcmask 261120
    %v368 = vsel %vm366, %v348, 0
    %370 = vmatpush.bf16.msra.mxu0 0
    %371 = vmatpush.bf16.msra.mxu0 0
    %372 = vmatpush.bf16.msra.mxu0 0
    %373 = vmatpush.bf16.msra.mxu0 0
    %374 = vmatpush.bf16.msra.mxu0 0
    %375 = vmatpush.bf16.msra.mxu0 0
    %376 = vmatpush.bf16.msra.mxu0 %v363
    %377 = vmatpush.bf16.msra.mxu0 %v362
    %378 = vmatmul.bf16.gmra.mxu0 %v368
    %v379 = vpop.f32.mrf.mxu0
    %v380 = vadd.f32 %v352, %v379
    %v381 = vpop.f32.mrf.mxu0
    %382 = vdwg.mxu0
    %383 = vst [vmem:[#allocation2] sm:$0x1] %v380
    // Predicated region
    $region22: #{tpu_custom_call.1} parent=1 // pred_check
      _
    $region23: #{tpu_custom_call.1} parent=1 // pred_check_branch
      %385 = sbr.rel (0) target = $region25
    $region24: #{tpu_custom_call.1} parent=1 // pred_region
      %387 = vsyncadd [#allocation3], 0
      %s389 = sshll.u32 [#allocation2], 4
      %s390 = int_to_ptr.vmem [resolvable:$true] %s389
      %s391 = sshll.u32 %s5, 4
      %s392 = int_to_ptr.hbm [resolvable:$true] %s391
      %394 = dma.vmem_to_hbm [thread:$0]  %s390, 16, %s392, [#allocation3]
    $region25: #{tpu_custom_call.1} parent=1 // pred_fallthru
      _
    // Predicated region
    $region26: #{tpu_custom_call.1} parent=1 // pred_check
      _
    $region27: #{tpu_custom_call.1} parent=1 // pred_check_branch
      %396 = sbr.rel (0) target = $region29
    $region28: #{tpu_custom_call.1} parent=1 // pred_region
      %398 = dma.done [#allocation3], 16
    $region29: #{tpu_custom_call.1} parent=1 // pred_fallthru
      _
    %399 = vsyncpa [#allocation3], 1

</llo_original>
